<compile_context>
chip_gen: v7x
topology: tpu7x:2x2x1
jax: 0.10.0
libtpu: 0.0.40
codegen_flags: <defaults>
</compile_context>

<pallas_src>
import functools

import jax
import jax.numpy as jnp
from jax.experimental import pallas as pl
from jax.experimental.pallas import tpu as pltpu


def _round_up(x, m):
    return (x + m - 1) // m * m


def _mlp_kernel(x_ref, w1_ref, b1_ref, w2_ref, b2_ref, w3t_ref, b3_ref, o_ref):
    # Layer 1: bf16 MXU matmul with f32 accumulation, bias + ReLU on the VPU.
    # Dropout(0.3) -> identity (eval mode).  x is cast f32->bf16 in-kernel (no extra HBM pass).
    x = x_ref[...].astype(jnp.bfloat16)
    h1 = jnp.dot(x, w1_ref[...], preferred_element_type=jnp.float32)
    h1 = jnp.maximum(h1 + b1_ref[...], 0.0).astype(jnp.bfloat16)  # bf16: halves spill width
    # Layer 2: bf16 MXU matmul, f32 accum, bias + ReLU (kept f32 for the layer-3 reduce).
    h2 = jnp.dot(h1, w2_ref[...], preferred_element_type=jnp.float32)
    h2 = jnp.maximum(h2 + b2_ref[...], 0.0)
    # Layer 3 (output head, O == 1): VPU broadcast-multiply + XLU lane reduce instead of a
    # 128x zero-padded MXU pass; store is an unpadded (block_b, 1) column.
    out = jnp.sum(h2 * w3t_ref[...], axis=-1, keepdims=True) + b3_ref[...]
    o_ref[...] = out.astype(o_ref.dtype)


@functools.partial(jax.jit, static_argnames=("block_b",))
def mlp_forward(x, w1, b1, w2, b2, w3, b3, *, block_b=1024):
    """Fused MLP forward.

    x: [B, F_in] f32; w1: [F_in, H1]; w2: [H1, H2]; w3: [H2, 1]; biases [1, *].
    Returns [B, 1] f32.  Matches the PyTorch module in eval mode (Dropout == identity),
    with bf16 operands / f32 accumulation on the two hidden matmuls.
    """
    B, F_in = x.shape
    H1 = w1.shape[1]
    H2 = w2.shape[1]
    O = w3.shape[1]
    if O != 1:
        # TODO(synk): general output_dim would need a (small) MXU head; the module spec
        # fixes output_dim=1, which the VPU-reduce head below assumes.
        raise NotImplementedError("mlp_forward is specialized for output_dim == 1")

    # bf16 weights for the MXU layers (tiny one-time casts); layer-3 weights stay f32 and
    # are passed transposed as a [1, H2] row for the in-kernel broadcast-multiply.
    w1b = w1.astype(jnp.bfloat16)
    w2b = w2.astype(jnp.bfloat16)
    w3t = w3.reshape(1, H2).astype(jnp.float32)
    b3r = b3.reshape(1, 1).astype(jnp.float32)

    # Batch tile: multiple of 8, capped so the grid has >= 2 steps whenever B > 8
    # (v7x megacore sharding via dimension_semantics=("parallel",)).
    # No batch padding: the final (possibly partial) block is masked by Pallas.
    block_b_eff = max(8, min(block_b, _round_up(pl.cdiv(B, 2), 8)))
    grid = (pl.cdiv(B, block_b_eff),)

    flops = 2 * B * (F_in * H1 + H1 * H2 + H2)
    bytes_accessed = (
        B * F_in * 4                    # x (f32, streamed once, cast in-kernel)
        + F_in * H1 * 2 + H1 * H2 * 2   # bf16 weights (fetched once, VMEM-resident)
        + H2 * 4                        # w3t (f32)
        + (H1 + H2 + 1) * 4             # biases
        + B * 4                         # unpadded output column
    )

    out = pl.pallas_call(
        _mlp_kernel,
        out_shape=jax.ShapeDtypeStruct((B, O), jnp.float32),
        grid_spec=pl.GridSpec(
            grid=grid,
            in_specs=[
                # batch tile of raw f32 input (last dim == full array dim, so no 128 pad)
                pl.BlockSpec((block_b_eff, F_in), lambda i: (i, 0)),
                # weights / biases: full arrays, constant index_map -> fetched once and
                # VMEM-resident across every grid step
                pl.BlockSpec((F_in, H1), lambda i: (0, 0)),
                pl.BlockSpec((1, H1), lambda i: (0, 0)),
                pl.BlockSpec((H1, H2), lambda i: (0, 0)),
                pl.BlockSpec((1, H2), lambda i: (0, 0)),
                pl.BlockSpec((1, H2), lambda i: (0, 0)),   # w3 transposed row
                pl.BlockSpec((1, 1), lambda i: (0, 0)),    # b3 scalar
            ],
            # unpadded O=1 output: last dim equals the full array dim (legal); tiny writeback
            out_specs=pl.BlockSpec((block_b_eff, O), lambda i: (i, 0)),
        ),
        compiler_params=pltpu.CompilerParams(
            dimension_semantics=("parallel",),
            vmem_limit_bytes=32 * 1024 * 1024,
        ),
        cost_estimate=pl.CostEstimate(
            flops=flops, transcendentals=0, bytes_accessed=bytes_accessed
        ),
    )(x, w1b, b1, w2b, b2, w3t, b3r)

    return out


def init_mlp_params(key, input_dim, hidden_dim=256, output_dim=1):
    """Deterministic parameter init (PyTorch nn.Linear-style uniform ranges)."""
    ks = jax.random.split(key, 6)

    def linear(kw, kb, fan_in, fan_out):
        bound = 1.0 / jnp.sqrt(fan_in)
        w = jax.random.uniform(kw, (fan_in, fan_out), jnp.float32, -bound, bound)
        b = jax.random.uniform(kb, (1, fan_out), jnp.float32, -bound, bound)
        return w, b

    w1, b1 = linear(ks[0], ks[1], input_dim, hidden_dim)
    w2, b2 = linear(ks[2], ks[3], hidden_dim, hidden_dim // 2)
    w3, b3 = linear(ks[4], ks[5], hidden_dim // 2, output_dim)
    return w1, b1, w2, b2, w3, b3


def mlp_reference(x, w1, b1, w2, b2, w3, b3):
    """Pure-JAX reference with the same numerics as the kernel (bf16 operands, f32 accum)."""
    xb = x.astype(jnp.bfloat16)
    h1 = jnp.dot(xb, w1.astype(jnp.bfloat16), preferred_element_type=jnp.float32) + b1
    h1 = jnp.maximum(h1, 0.0).astype(jnp.bfloat16)
    h2 = jnp.dot(h1, w2.astype(jnp.bfloat16), preferred_element_type=jnp.float32) + b2
    h2 = jnp.maximum(h2, 0.0)
    return jnp.sum(h2 * w3.reshape(1, -1), axis=-1, keepdims=True) + b3.reshape(1, 1)


if __name__ == "__main__":
    key = jax.random.PRNGKey(0)
    k_x, k_p = jax.random.split(key)

    # X_train_tensor is flattened to [N, input_dim]; small but representative shapes.
    batch = 256          # 2 grid steps of 128 -> both TensorCores busy on v7x
    input_dim = 96       # deliberately not a multiple of 128: exercises the unpadded F_in path
    hidden_dim = 256     # matches the module's default hidden_dim
    output_dim = 1

    x = jax.random.normal(k_x, (batch, input_dim), dtype=jnp.float32)
    params = init_mlp_params(k_p, input_dim, hidden_dim, output_dim)

    out = mlp_forward(x, *params)
    out = jax.block_until_ready(out)

    ref = mlp_reference(x, *params)
    assert out.shape == (batch, output_dim)
    assert jnp.allclose(out, ref, atol=5e-3, rtol=5e-3)

    # TODO(synk): Dropout(0.3) is omitted (inference/eval semantics == identity);
    # training-mode stochastic masking would use pltpu.prng_seed/prng_random_bits.
    print("KERNEL_OK")
</pallas_src>

<mosaic_0001>
module attributes {stable_mosaic.version = 11 : i64} {
  func.func @_mlp_kernel(%arg0: i32, %arg1: memref<128x96xf32, #tpu.memory_space<vmem>>, %arg2: memref<96x256xbf16, #tpu.memory_space<vmem>>, %arg3: memref<1x256xf32, #tpu.memory_space<vmem>>, %arg4: memref<256x128xbf16, #tpu.memory_space<vmem>>, %arg5: memref<1x128xf32, #tpu.memory_space<vmem>>, %arg6: memref<1x128xf32, #tpu.memory_space<vmem>>, %arg7: memref<1x1xf32, #tpu.memory_space<vmem>>, %arg8: memref<128x1xf32, #tpu.memory_space<vmem>>) attributes {dimension_semantics = [#tpu.dimension_semantics<parallel>], iteration_bounds = array<i64: 2>, scalar_prefetch = 0 : i64, scratch_operands = 0 : i64, tpu.core_type = #tpu.core_type<tc>, window_params = [{transform_indices = @transform_0, window_bounds = array<i64: 128, 96>}, {pipeline_mode = #tpu.pipeline_mode<synchronous>, transform_indices = @transform_1, window_bounds = array<i64: 96, 256>}, {pipeline_mode = #tpu.pipeline_mode<synchronous>, transform_indices = @transform_2, window_bounds = array<i64: 1, 256>}, {pipeline_mode = #tpu.pipeline_mode<synchronous>, transform_indices = @transform_3, window_bounds = array<i64: 256, 128>}, {pipeline_mode = #tpu.pipeline_mode<synchronous>, transform_indices = @transform_4, window_bounds = array<i64: 1, 128>}, {pipeline_mode = #tpu.pipeline_mode<synchronous>, transform_indices = @transform_5, window_bounds = array<i64: 1, 128>}, {pipeline_mode = #tpu.pipeline_mode<synchronous>, transform_indices = @transform_6, window_bounds = array<i64: 1, 1>}, {transform_indices = @transform_7, window_bounds = array<i64: 128, 1>}]} {
    %c0 = arith.constant 0 : index
    %c0_0 = arith.constant 0 : index
    %0 = vector.load %arg1[%c0, %c0_0] : memref<128x96xf32, #tpu.memory_space<vmem>>, vector<128x96xf32>
    %1 = arith.truncf %0 : vector<128x96xf32> to vector<128x96xbf16>
    %c0_1 = arith.constant 0 : index
    %c0_2 = arith.constant 0 : index
    %2 = vector.load %arg2[%c0_1, %c0_2] : memref<96x256xbf16, #tpu.memory_space<vmem>>, vector<96x256xbf16>
    %cst = arith.constant dense<0.000000e+00> : vector<128x256xf32>
    %3 = tpu.matmul %1, %2, %cst {dimension_numbers = #tpu.dot_dimension_numbers<[1], [0], [0], [1], [0, 0, 1, 1], [], []>} : vector<128x96xbf16>, vector<96x256xbf16>, vector<128x256xf32> -> vector<128x256xf32>
    %c0_3 = arith.constant 0 : index
    %c0_4 = arith.constant 0 : index
    %4 = vector.load %arg3[%c0_3, %c0_4] : memref<1x256xf32, #tpu.memory_space<vmem>>, vector<1x256xf32>
    %5 = vector.broadcast %4 : vector<1x256xf32> to vector<128x256xf32>
    %6 = arith.addf %3, %5 : vector<128x256xf32>
    %cst_5 = arith.constant 0.000000e+00 : f32
    %7 = vector.broadcast %cst_5 : f32 to vector<128x256xf32>
    %8 = arith.maximumf %6, %7 : vector<128x256xf32>
    %9 = arith.truncf %8 : vector<128x256xf32> to vector<128x256xbf16>
    %c0_6 = arith.constant 0 : index
    %c0_7 = arith.constant 0 : index
    %10 = vector.load %arg4[%c0_6, %c0_7] : memref<256x128xbf16, #tpu.memory_space<vmem>>, vector<256x128xbf16>
    %cst_8 = arith.constant dense<0.000000e+00> : vector<128x128xf32>
    %11 = tpu.matmul %9, %10, %cst_8 {dimension_numbers = #tpu.dot_dimension_numbers<[1], [0], [0], [1], [0, 0, 1, 1], [], []>} : vector<128x256xbf16>, vector<256x128xbf16>, vector<128x128xf32> -> vector<128x128xf32>
    %c0_9 = arith.constant 0 : index
    %c0_10 = arith.constant 0 : index
    %12 = vector.load %arg5[%c0_9, %c0_10] : memref<1x128xf32, #tpu.memory_space<vmem>>, vector<1x128xf32>
    %13 = vector.broadcast %12 : vector<1x128xf32> to vector<128x128xf32>
    %14 = arith.addf %11, %13 : vector<128x128xf32>
    %cst_11 = arith.constant 0.000000e+00 : f32
    %15 = vector.broadcast %cst_11 : f32 to vector<128x128xf32>
    %16 = arith.maximumf %14, %15 : vector<128x128xf32>
    %c0_12 = arith.constant 0 : index
    %c0_13 = arith.constant 0 : index
    %17 = vector.load %arg6[%c0_12, %c0_13] : memref<1x128xf32, #tpu.memory_space<vmem>>, vector<1x128xf32>
    %18 = vector.broadcast %17 : vector<1x128xf32> to vector<128x128xf32>
    %19 = arith.mulf %16, %18 : vector<128x128xf32>
    %cst_14 = arith.constant dense<0.000000e+00> : vector<128xf32>
    %20 = vector.multi_reduction <add>, %19, %cst_14 [1] : vector<128x128xf32> to vector<128xf32>
    %21 = vector.shape_cast %20 : vector<128xf32> to vector<128x1xf32>
    %c0_15 = arith.constant 0 : index
    %c0_16 = arith.constant 0 : index
    %22 = vector.load %arg7[%c0_15, %c0_16] : memref<1x1xf32, #tpu.memory_space<vmem>>, vector<1x1xf32>
    %23 = vector.broadcast %22 : vector<1x1xf32> to vector<128x1xf32>
    %24 = arith.addf %21, %23 : vector<128x1xf32>
    %c0_17 = arith.constant 0 : index
    %c0_18 = arith.constant 0 : index
    %25 = vector.load %arg8[%c0_17, %c0_18] : memref<128x1xf32, #tpu.memory_space<vmem>>, vector<128x1xf32>
    tpu.vector_store %arg8[%c0_17, %c0_18], %24 {strides = array<i32>} : memref<128x1xf32, #tpu.memory_space<vmem>>, vector<128x1xf32>,
    return
  }
  func.func @transform_0(%arg0: i32) -> (i32, i32) {
    %c0_i32 = arith.constant 0 : i32
    %c0_i32_0 = arith.constant 0 : i32
    return %arg0, %c0_i32 : i32, i32
  }
  func.func @transform_1(%arg0: i32) -> (i32, i32) {
    %c0_i32 = arith.constant 0 : i32
    %c0_i32_0 = arith.constant 0 : i32
    %c0_i32_1 = arith.constant 0 : i32
    return %c0_i32, %c0_i32_0 : i32, i32
  }
  func.func @transform_2(%arg0: i32) -> (i32, i32) {
    %c0_i32 = arith.constant 0 : i32
    %c0_i32_0 = arith.constant 0 : i32
    %c0_i32_1 = arith.constant 0 : i32
    return %c0_i32, %c0_i32_0 : i32, i32
  }
  func.func @transform_3(%arg0: i32) -> (i32, i32) {
    %c0_i32 = arith.constant 0 : i32
    %c0_i32_0 = arith.constant 0 : i32
    %c0_i32_1 = arith.constant 0 : i32
    return %c0_i32, %c0_i32_0 : i32, i32
  }
  func.func @transform_4(%arg0: i32) -> (i32, i32) {
    %c0_i32 = arith.constant 0 : i32
    %c0_i32_0 = arith.constant 0 : i32
    %c0_i32_1 = arith.constant 0 : i32
    return %c0_i32, %c0_i32_0 : i32, i32
  }
  func.func @transform_5(%arg0: i32) -> (i32, i32) {
    %c0_i32 = arith.constant 0 : i32
    %c0_i32_0 = arith.constant 0 : i32
    %c0_i32_1 = arith.constant 0 : i32
    return %c0_i32, %c0_i32_0 : i32, i32
  }
  func.func @transform_6(%arg0: i32) -> (i32, i32) {
    %c0_i32 = arith.constant 0 : i32
    %c0_i32_0 = arith.constant 0 : i32
    %c0_i32_1 = arith.constant 0 : i32
    return %c0_i32, %c0_i32_0 : i32, i32
  }
  func.func @transform_7(%arg0: i32) -> (i32, i32) {
    %c0_i32 = arith.constant 0 : i32
    %c0_i32_0 = arith.constant 0 : i32
    return %arg0, %c0_i32 : i32, i32
  }
}

</mosaic_0001>

<llo_original>
// kernel: mlp_forward.1
$region0: #{mlp_forward.1}
  #allocation0 [shape = 'u32[]', space=smem, size = 0x4, offset = 0x4, fixed_abs, tag = 'smem constant byte address 0x4 - core index']
  #allocation1 [shape = 'u32[144,128]{1,0:T(1,128)}', space=vmem, size = 0x12000, scoped, tag = 'internal scratch']
  #allocation2 [shape = 'f32[1,1]{1,0:T(1,128)S(1)}', space=vmem, size = 0x200, scoped, tag = 'scoped memory for mlp_forward.1']
  %s0 = inlined_call_operand.vmem [shape: f32[256,96], index: 0, kind: input, shape index: {}]
  %s1 = inlined_call_operand.vmem [shape: bf16[96,256], index: 1, kind: input, shape index: {}]
  %s2 = inlined_call_operand.vmem [shape: f32[1,256], index: 2, kind: input, shape index: {}]
  %s3 = inlined_call_operand.vmem [shape: bf16[256,128], index: 3, kind: input, shape index: {}]
  %s4 = inlined_call_operand.vmem [shape: f32[1,128], index: 4, kind: input, shape index: {}]
  %s5 = inlined_call_operand.vmem [shape: f32[1,128], index: 5, kind: input, shape index: {}]
  %s6 = inlined_call_operand.<no memory space> [shape: f32[1,1], index: 6, kind: input, shape index: {}]
  %s7 = inlined_call_operand.vmem [shape: f32[256,1], index: 7, kind: output, shape index: {}]
  %s8 = sld [smem:[#allocation0]]
  $region61: #{mlp_forward.1} parent=0
    _
  %s10 = ssub.s32 1, %s8
  %s11 = scalar_select 0, %s10, %s8
  %v12 = vstv %s6
  %13 = vst [vmem:[#allocation2] sm:$0x1] %v12
  loop: start=0, step=1, limit=4
  $region2: #{mlp_forward.1} parent=0 // loop_pre_header
    _
  $region3: #{mlp_forward.1} parent=0 // loop_header
    %s15 = sphi 0, %s19
    %p16 = scmp.ge.s32.totalorder %s15, 4
    %s25 = sphi 0, %s27
    %s28 = sphi 0, %s25
    %s29 = sphi 0, %s28
    %s45 = sphi 0, %s29
    %s49 = sphi 0, %s49
    %s51 = sphi 0, %s49
    %s52 = sphi 0, %s51
    %s66 = sphi 0, %s52
    %s70 = sphi 0, %s70
    %s72 = sphi 0, %s70
    %s73 = sphi 0, %s72
    %s87 = sphi 0, %s73
    %s91 = sphi 0, %s91
    %s93 = sphi 0, %s91
    %s94 = sphi 0, %s93
    %s108 = sphi 0, %s94
    %s112 = sphi 0, %s112
    %s114 = sphi 0, %s112
    %s115 = sphi 0, %s114
    %s129 = sphi 0, %s115
    %s133 = sphi 0, %s133
    %s135 = sphi 0, %s133
    %s136 = sphi 0, %s135
    %s150 = sphi 0, %s136
    %s154 = sphi 0, %s154
    %s156 = sphi 0, %s154
    %s157 = sphi 0, %s156
    %s171 = sphi 0, %s157
    %s177 = sphi 0, %s179
    %s180 = sphi 0, %s177
    %s181 = sphi 0, %s180
    %s197 = sphi 0, %s181
  $region4: #{mlp_forward.1} parent=0 // loop_header_branch
    %18 = sbr.rel (%p16) target = $region8
  $region5: #{mlp_forward.1} parent=0 // loop_body
    %s20 = ssub.s32 %s15, 1
    %s21 = ssub.s32 %s15, 2
    %s22 = sadd.s32 %s15, 1
    %s23 = ssub.s32 %s15, %s22
    %p24 = scmp.eq.s32.totalorder %s23, 0
    %s26 = sadd.s32 %s25, 1
    %s27 = scalar_select %p24, %s25, %s26
    %p30 = pneg %p24
    %p31 = scmp.eq.s32.totalorder %s15, 1
    %p32 = por %p30, %p31
    %p33 = scmp.ne.s32.totalorder %s25, %s28
    %p34 = scmp.eq.s32.totalorder %s15, 0
    %p35 = por %p33, %p34
    %p36 = scmp.ne.s32.totalorder %s25, %s28
    %p37 = scmp.eq.s32.totalorder %s20, 1
    %p38 = por %p36, %p37
    %p39 = scmp.ne.s32.totalorder %s28, %s29
    %p40 = scmp.eq.s32.totalorder %s20, 0
    %p41 = por %p39, %p40
    %p42 = scmp.ne.s32.totalorder %s28, %s29
    %p43 = scmp.eq.s32.totalorder %s21, 1
    %p44 = por %p42, %p43
    %p46 = scmp.ne.s32.totalorder %s29, %s45
    %p47 = scmp.eq.s32.totalorder %s21, 0
    %p48 = por %p46, %p47
    %s50 = sadd.s32 %s49, 1
    %p53 = scmp.eq.s32.totalorder %s15, 1
    %p54 = scmp.ne.s32.totalorder %s49, %s51
    %p55 = scmp.eq.s32.totalorder %s15, 0
    %p56 = por %p54, %p55
    %p57 = scmp.ne.s32.totalorder %s49, %s51
    %p58 = scmp.eq.s32.totalorder %s20, 1
    %p59 = por %p57, %p58
    %p60 = scmp.ne.s32.totalorder %s51, %s52
    %p61 = scmp.eq.s32.totalorder %s20, 0
    %p62 = por %p60, %p61
    %p63 = scmp.ne.s32.totalorder %s51, %s52
    %p64 = scmp.eq.s32.totalorder %s21, 1
    %p65 = por %p63, %p64
    %p67 = scmp.ne.s32.totalorder %s52, %s66
    %p68 = scmp.eq.s32.totalorder %s21, 0
    %p69 = por %p67, %p68
    %s71 = sadd.s32 %s70, 1
    %p74 = scmp.eq.s32.totalorder %s15, 1
    %p75 = scmp.ne.s32.totalorder %s70, %s72
    %p76 = scmp.eq.s32.totalorder %s15, 0
    %p77 = por %p75, %p76
    %p78 = scmp.ne.s32.totalorder %s70, %s72
    %p79 = scmp.eq.s32.totalorder %s20, 1
    %p80 = por %p78, %p79
    %p81 = scmp.ne.s32.totalorder %s72, %s73
    %p82 = scmp.eq.s32.totalorder %s20, 0
    %p83 = por %p81, %p82
    %p84 = scmp.ne.s32.totalorder %s72, %s73
    %p85 = scmp.eq.s32.totalorder %s21, 1
    %p86 = por %p84, %p85
    %p88 = scmp.ne.s32.totalorder %s73, %s87
    %p89 = scmp.eq.s32.totalorder %s21, 0
    %p90 = por %p88, %p89
    %s92 = sadd.s32 %s91, 1
    %p95 = scmp.eq.s32.totalorder %s15, 1
    %p96 = scmp.ne.s32.totalorder %s91, %s93
    %p97 = scmp.eq.s32.totalorder %s15, 0
    %p98 = por %p96, %p97
    %p99 = scmp.ne.s32.totalorder %s91, %s93
    %p100 = scmp.eq.s32.totalorder %s20, 1
    %p101 = por %p99, %p100
    %p102 = scmp.ne.s32.totalorder %s93, %s94
    %p103 = scmp.eq.s32.totalorder %s20, 0
    %p104 = por %p102, %p103
    %p105 = scmp.ne.s32.totalorder %s93, %s94
    %p106 = scmp.eq.s32.totalorder %s21, 1
    %p107 = por %p105, %p106
    %p109 = scmp.ne.s32.totalorder %s94, %s108
    %p110 = scmp.eq.s32.totalorder %s21, 0
    %p111 = por %p109, %p110
    %s113 = sadd.s32 %s112, 1
    %p116 = scmp.eq.s32.totalorder %s15, 1
    %p117 = scmp.ne.s32.totalorder %s112, %s114
    %p118 = scmp.eq.s32.totalorder %s15, 0
    %p119 = por %p117, %p118
    %p120 = scmp.ne.s32.totalorder %s112, %s114
    %p121 = scmp.eq.s32.totalorder %s20, 1
    %p122 = por %p120, %p121
    %p123 = scmp.ne.s32.totalorder %s114, %s115
    %p124 = scmp.eq.s32.totalorder %s20, 0
    %p125 = por %p123, %p124
    %p126 = scmp.ne.s32.totalorder %s114, %s115
    %p127 = scmp.eq.s32.totalorder %s21, 1
    %p128 = por %p126, %p127
    %p130 = scmp.ne.s32.totalorder %s115, %s129
    %p131 = scmp.eq.s32.totalorder %s21, 0
    %p132 = por %p130, %p131
    %s134 = sadd.s32 %s133, 1
    %p137 = scmp.eq.s32.totalorder %s15, 1
    %p138 = scmp.ne.s32.totalorder %s133, %s135
    %p139 = scmp.eq.s32.totalorder %s15, 0
    %p140 = por %p138, %p139
    %p141 = scmp.ne.s32.totalorder %s133, %s135
    %p142 = scmp.eq.s32.totalorder %s20, 1
    %p143 = por %p141, %p142
    %p144 = scmp.ne.s32.totalorder %s135, %s136
    %p145 = scmp.eq.s32.totalorder %s20, 0
    %p146 = por %p144, %p145
    %p147 = scmp.ne.s32.totalorder %s135, %s136
    %p148 = scmp.eq.s32.totalorder %s21, 1
    %p149 = por %p147, %p148
    %p151 = scmp.ne.s32.totalorder %s136, %s150
    %p152 = scmp.eq.s32.totalorder %s21, 0
    %p153 = por %p151, %p152
    %s155 = sadd.s32 %s154, 1
    %p158 = scmp.eq.s32.totalorder %s15, 1
    %p159 = scmp.ne.s32.totalorder %s154, %s156
    %p160 = scmp.eq.s32.totalorder %s15, 0
    %p161 = por %p159, %p160
    %p162 = scmp.ne.s32.totalorder %s154, %s156
    %p163 = scmp.eq.s32.totalorder %s20, 1
    %p164 = por %p162, %p163
    %p165 = scmp.ne.s32.totalorder %s156, %s157
    %p166 = scmp.eq.s32.totalorder %s20, 0
    %p167 = por %p165, %p166
    %p168 = scmp.ne.s32.totalorder %s156, %s157
    %p169 = scmp.eq.s32.totalorder %s21, 1
    %p170 = por %p168, %p169
    %p172 = scmp.ne.s32.totalorder %s157, %s171
    %p173 = scmp.eq.s32.totalorder %s21, 0
    %p174 = por %p172, %p173
    %s175 = ssub.s32 %s15, %s22
    %p176 = scmp.eq.s32.totalorder %s175, 0
    %s178 = sadd.s32 %s177, 1
    %s179 = scalar_select %p176, %s177, %s178
    %p182 = pneg %p176
    %p183 = scmp.eq.s32.totalorder %s15, 1
    %p184 = por %p182, %p183
    %p185 = scmp.ne.s32.totalorder %s177, %s180
    %p186 = scmp.eq.s32.totalorder %s15, 0
    %p187 = por %p185, %p186
    %p188 = scmp.ne.s32.totalorder %s177, %s180
    %p189 = scmp.eq.s32.totalorder %s20, 1
    %p190 = por %p188, %p189
    %p191 = scmp.ne.s32.totalorder %s180, %s181
    %p192 = scmp.eq.s32.totalorder %s20, 0
    %p193 = por %p191, %p192
    %p194 = scmp.ne.s32.totalorder %s180, %s181
    %p195 = scmp.eq.s32.totalorder %s21, 1
    %p196 = por %p194, %p195
    %p198 = scmp.ne.s32.totalorder %s181, %s197
    %p199 = scmp.eq.s32.totalorder %s21, 0
    %p200 = por %p198, %p199
    %p201 = scmp.le.s32.totalorder 1, %s15
    %p202 = scmp.lt.s32.totalorder %s15, 3
    %p203 = pnand %p201, %p202
    %p204 = pneg %p203
    // Predicated region
    $region9: #{mlp_forward.1} parent=5 // pred_check
      _
    $region10: #{mlp_forward.1} parent=5 // pred_check_branch
      %206 = sbr.rel (%p203) target = $region12
    $region11: #{mlp_forward.1} parent=5 // pred_region
      %s207 = ssub.s32 %s15, 1
      // Predicated region
      $region13: #{mlp_forward.1} parent=11 // pred_check
        %p208 = pneg %p62
      $region14: #{mlp_forward.1} parent=11 // pred_check_branch
        %210 = sbr.rel (%p208) target = $region16
      $region15: #{mlp_forward.1} parent=11 // pred_region
        _
      $region16: #{mlp_forward.1} parent=11 // pred_fallthru
        _
      // Predicated region
      $region17: #{mlp_forward.1} parent=11 // pred_check
        %p211 = pneg %p83
      $region18: #{mlp_forward.1} parent=11 // pred_check_branch
        %213 = sbr.rel (%p211) target = $region20
      $region19: #{mlp_forward.1} parent=11 // pred_region
        _
      $region20: #{mlp_forward.1} parent=11 // pred_fallthru
        _
      // Predicated region
      $region21: #{mlp_forward.1} parent=11 // pred_check
        %p214 = pneg %p104
      $region22: #{mlp_forward.1} parent=11 // pred_check_branch
        %216 = sbr.rel (%p214) target = $region24
      $region23: #{mlp_forward.1} parent=11 // pred_region
        _
      $region24: #{mlp_forward.1} parent=11 // pred_fallthru
        _
      // Predicated region
      $region25: #{mlp_forward.1} parent=11 // pred_check
        %p217 = pneg %p125
      $region26: #{mlp_forward.1} parent=11 // pred_check_branch
        %219 = sbr.rel (%p217) target = $region28
      $region27: #{mlp_forward.1} parent=11 // pred_region
        _
      $region28: #{mlp_forward.1} parent=11 // pred_fallthru
        _
      // Predicated region
      $region29: #{mlp_forward.1} parent=11 // pred_check
        %p220 = pneg %p146
      $region30: #{mlp_forward.1} parent=11 // pred_check_branch
        %222 = sbr.rel (%p220) target = $region32
      $region31: #{mlp_forward.1} parent=11 // pred_region
        _
      $region32: #{mlp_forward.1} parent=11 // pred_fallthru
        _
      // Predicated region
      $region33: #{mlp_forward.1} parent=11 // pred_check
        %p223 = pneg %p167
      $region34: #{mlp_forward.1} parent=11 // pred_check_branch
        %225 = sbr.rel (%p223) target = $region36
      $region35: #{mlp_forward.1} parent=11 // pred_region
        _
      $region36: #{mlp_forward.1} parent=11 // pred_fallthru
        _
    $region12: #{mlp_forward.1} parent=5 // pred_fallthru
      _
    %p226 = scmp.lt.s32.totalorder %s15, 2
    // Predicated region
    $region37: #{mlp_forward.1} parent=5 // pred_check
      %p227 = pneg %p226
    $region38: #{mlp_forward.1} parent=5 // pred_check_branch
      %229 = sbr.rel (%p227) target = $region40
    $region39: #{mlp_forward.1} parent=5 // pred_region
      // Predicated region
      $region41: #{mlp_forward.1} parent=39 // pred_check
        %p230 = pneg %p35
      $region42: #{mlp_forward.1} parent=39 // pred_check_branch
        %232 = sbr.rel (%p230) target = $region44
      $region43: #{mlp_forward.1} parent=39 // pred_region
        %s233 = smul.u32 16, %s15
        %p234 = scmp.lt.s32.totalorder %s233, 31
        %s235 = scalar_select %p234, %s233, 31
        %s236 = smul.addr %s235, 8
        %s237 = scalar_lea.vmem %s0, %s236
        %s238 = smul.u32 16, %s15
      $region44: #{mlp_forward.1} parent=39 // pred_fallthru
        _
    $region40: #{mlp_forward.1} parent=5 // pred_fallthru
      _
    %p239 = scmp.le.s32.totalorder 1, %s15
    %p240 = scmp.lt.s32.totalorder %s15, 3
    %p241 = pnand %p239, %p240
    %p242 = pneg %p241
    // Predicated region
    $region45: #{mlp_forward.1} parent=5 // pred_check
      _
    $region46: #{mlp_forward.1} parent=5 // pred_check_branch
      %244 = sbr.rel (%p241) target = $region48
    $region47: #{mlp_forward.1} parent=5 // pred_region
      %s245 = ssub.s32 %s15, 1
      %s246 = smul.u32 16, %s20
      %p247 = scmp.lt.s32.totalorder %s246, 31
      %s248 = scalar_select %p247, %s246, 31
      %s249 = smul.addr %s248, 8
      %s250 = scalar_lea.vmem %s0, %s249
      %p251 = pneg %p41
      %p252 = pneg %p38
      %p253 = pneg %p62
      %p254 = pneg %p59
      %p255 = pneg %p83
      %p256 = pneg %p80
      %p257 = pneg %p104
      %p258 = pneg %p101
      %p259 = pneg %p125
      %p260 = pneg %p122
      %p261 = pneg %p146
      %p262 = pneg %p143
      %p263 = pneg %p167
      %p264 = pneg %p164
      %p265 = pneg %p193
      %p266 = pneg %p190
      %s267 = smul.u32 16, %s20
      %p268 = scmp.lt.s32.totalorder %s267, 31
      %s269 = scalar_select %p268, %s267, 31
      %s270 = smul.addr %s269, 8
      %s271 = scalar_lea.vmem %s7, %s270
      %s272 = smul.u32 16, %s20
      %p273 = scmp.lt.s32.totalorder %s272, 31
      %s274 = scalar_select %p273, %s272, 31
      %s275 = smul.addr %s274, 8
      %s276 = scalar_lea.vmem %s0, %s275
      %s277 = smul.u32 16, %s20
      %s278 = smul.u32 16, %s20
      %p279 = scmp.lt.s32.totalorder %s278, 31
      %s280 = scalar_select %p279, %s278, 31
      %s281 = smul.addr %s280, 8
      %s282 = scalar_lea.vmem %s7, %s281
      %s283 = smul.u32 16, %s20
      %v285 = vld [vmem:[%s276] sm:$0xff]
      %v286 = vld [vmem:[%s276 + $0x8] sm:$0xff]
      %v287 = vld [vmem:[%s276 + $0x10] sm:$0xff]
      %v288 = vld [vmem:[%s276 + $0x18] sm:$0xff]
      %v289 = vld [vmem:[%s276 + $0x20] sm:$0xff]
      %v290 = vld [vmem:[%s276 + $0x28] sm:$0xff]
      %v291 = vld [vmem:[%s276 + $0x30] sm:$0xff]
      %v292 = vld [vmem:[%s276 + $0x38] sm:$0xff]
      %v293 = vld [vmem:[%s276 + $0x40] sm:$0xff]
      %v294 = vld [vmem:[%s276 + $0x48] sm:$0xff]
      %v295 = vld [vmem:[%s276 + $0x50] sm:$0xff]
      %v296 = vld [vmem:[%s276 + $0x58] sm:$0xff]
      %v297 = vld [vmem:[%s276 + $0x60] sm:$0xff]
      %v298 = vld [vmem:[%s276 + $0x68] sm:$0xff]
      %v299 = vld [vmem:[%s276 + $0x70] sm:$0xff]
      %v300 = vld [vmem:[%s276 + $0x78] sm:$0xff]
      %v301 = vpack.c.bf16 %v286, %v285
      %v302 = vpack.c.bf16 %v288, %v287
      %v303 = vpack.c.bf16 %v290, %v289
      %v304 = vpack.c.bf16 %v292, %v291
      %v305 = vpack.c.bf16 %v294, %v293
      %v306 = vpack.c.bf16 %v296, %v295
      %v307 = vpack.c.bf16 %v298, %v297
      %v308 = vpack.c.bf16 %v300, %v299
      %v309 = vld [vmem:[%s1] sm:$0xff]
      %v310 = vld [vmem:[%s1 + $0x8] sm:$0xff]
      %v311 = vld [vmem:[%s1 + $0x10] sm:$0xff]
      %v312 = vld [vmem:[%s1 + $0x18] sm:$0xff]
      %v313 = vld [vmem:[%s1 + $0x20] sm:$0xff]
      %v314 = vld [vmem:[%s1 + $0x28] sm:$0xff]
      %v315 = vld [vmem:[%s1 + $0x30] sm:$0xff]
      %v316 = vld [vmem:[%s1 + $0x38] sm:$0xff]
      %v317 = vld [vmem:[%s1 + $0x40] sm:$0xff]
      %v318 = vld [vmem:[%s1 + $0x48] sm:$0xff]
      %v319 = vld [vmem:[%s1 + $0x50] sm:$0xff]
      %v320 = vld [vmem:[%s1 + $0x58] sm:$0xff]
      %v321 = vld [vmem:[%s2] sm:$0x3]
      %v323 = vlaneseq
      %v324 = vshrl.u32 %v323, 7
      %v325 = vsub.s32 0, %v324
      %v326 = vrot.slane %v321, %v325
      %v327 = vlaneseq
      %v328 = vshrl.u32 %v327, 7
      %v329 = vsub.s32 1, %v328
      %v330 = vrot.slane %v321, %v329
      %v345 = vunpack.c.l.b16 %v309
      %v346 = vunpack.c.h.b16 %v309
      %v347 = vunpack.c.l.b16 %v310
      %v348 = vunpack.c.h.b16 %v310
      %v349 = vunpack.c.l.b16 %v311
      %v350 = vunpack.c.h.b16 %v311
      %v351 = vunpack.c.l.b16 %v312
      %v352 = vunpack.c.h.b16 %v312
      %v353 = vunpack.c.l.b16 %v313
      %v354 = vunpack.c.h.b16 %v313
      %v355 = vunpack.c.l.b16 %v314
      %v356 = vunpack.c.h.b16 %v314
      %v357 = vunpack.c.l.b16 %v315
      %v358 = vunpack.c.h.b16 %v315
      %v359 = vunpack.c.l.b16 %v316
      %v360 = vunpack.c.h.b16 %v316
      %v361 = vunpack.c.l.b16 %v317
      %v362 = vunpack.c.h.b16 %v317
      %v363 = vunpack.c.l.b16 %v318
      %v364 = vunpack.c.h.b16 %v318
      %v365 = vunpack.c.l.b16 %v319
      %v366 = vunpack.c.h.b16 %v319
      %v367 = vunpack.c.l.b16 %v320
      %v368 = vunpack.c.h.b16 %v320
      %v369 = vpack.c.b16 %v347, %v345
      %v370 = vpack.c.b16 %v348, %v346
      %v371 = vpack.c.b16 %v351, %v349
      %v372 = vpack.c.b16 %v352, %v350
      %v373 = vpack.c.b16 %v355, %v353
      %v374 = vpack.c.b16 %v356, %v354
      %v375 = vpack.c.b16 %v359, %v357
      %v376 = vpack.c.b16 %v360, %v358
      %v377 = vpack.c.b16 %v363, %v361
      %v378 = vpack.c.b16 %v364, %v362
      %v379 = vpack.c.b16 %v367, %v365
      %v380 = vpack.c.b16 %v368, %v366
      %vm393 = vcmask 785408
      %v395 = vsel %vm393, %v301, 0
      %v398 = vsel %vm393, %v302, 0
      %v401 = vsel %vm393, %v303, 0
      %v404 = vsel %vm393, %v304, 0
      %v407 = vsel %vm393, %v305, 0
      %v410 = vsel %vm393, %v306, 0
      %v413 = vsel %vm393, %v307, 0
      %v416 = vsel %vm393, %v308, 0
      %418 = vmatprep.subr.bf16.mxu0 %v370
      %419 = vmatpush1.bf16.msra.mxu0 %v369
      %420 = vmatprep.subr.bf16.mxu0 %v372
      %421 = vmatpush1.bf16.msra.mxu0 %v371
      %422 = vmatprep.subr.bf16.mxu0 %v374
      %423 = vmatpush1.bf16.msra.mxu0 %v373
      %424 = vmatprep.subr.bf16.mxu0 %v376
      %425 = vmatpush1.bf16.msra.mxu0 %v375
      %426 = vmatprep.subr.bf16.mxu0 %v378
      %427 = vmatpush1.bf16.msra.mxu0 %v377
      %428 = vmatprep.subr.bf16.mxu0 %v380
      %429 = vmatpush1.bf16.msra.mxu0 %v379
      %430 = vmatprep.subr.bf16.mxu0 0
      %431 = vmatpush1.bf16.msra.mxu0 0
      %432 = vmatprep.subr.bf16.mxu0 0
      %433 = vmatpush1.bf16.msra.mxu0 0
      %434 = vmatprep.subr.bf16.mxu0 0
      %435 = vmatpush1.bf16.msra.mxu0 0
      %436 = vmatprep.subr.bf16.mxu0 0
      %437 = vmatpush1.bf16.msra.mxu0 0
      %438 = vmatprep.subr.bf16.mxu0 0
      %439 = vmatpush1.bf16.msra.mxu0 0
      %440 = vmatprep.subr.bf16.mxu0 0
      %441 = vmatpush1.bf16.msra.mxu0 0
      %442 = vmatprep.subr.bf16.mxu0 0
      %443 = vmatpush1.bf16.msra.mxu0 0
      %444 = vmatprep.subr.bf16.mxu0 0
      %445 = vmatpush1.bf16.msra.mxu0 0
      %446 = vmatprep.subr.bf16.mxu0 0
      %447 = vmatpush1.bf16.msra.mxu0 0
      %448 = vmatprep.subr.bf16.mxu0 0
      %449 = vmatpush1.bf16.msra.mxu0 0
      %450 = vmatprep.mubr.bf16.mxu0 0
      %451 = vmatmul.mubr.bf16.gmra.mrb[0].mxu0 %v395
      %v452 = vpop.f32.mrb[0].mxu0
      %v453 = vadd.f32 %v326, %v452
      %v454 = vpop.f32.mrb[0].mxu0
      %v455 = vadd.f32 %v330, %v454
      %v456 = vpop.f32.mrb[0].mxu0
      %v457 = vadd.f32 %v326, %v456
      %v458 = vpop.f32.mrb[0].mxu0
      %v459 = vadd.f32 %v330, %v458
      %460 = vmatprep.mubr.bf16.mxu0 0
      %461 = vmatmul.mubr.bf16.gmra.mrb[0].mxu0 %v398
      %v462 = vpop.f32.mrb[0].mxu0
      %v463 = vadd.f32 %v326, %v462
      %v464 = vpop.f32.mrb[0].mxu0
      %v465 = vadd.f32 %v330, %v464
      %v466 = vpop.f32.mrb[0].mxu0
      %v467 = vadd.f32 %v326, %v466
      %v468 = vpop.f32.mrb[0].mxu0
      %v469 = vadd.f32 %v330, %v468
      %470 = vmatprep.mubr.bf16.mxu0 0
      %471 = vmatmul.mubr.bf16.gmra.mrb[0].mxu0 %v401
      %v472 = vpop.f32.mrb[0].mxu0
      %v473 = vadd.f32 %v326, %v472
      %v474 = vpop.f32.mrb[0].mxu0
      %v475 = vadd.f32 %v330, %v474
      %v476 = vpop.f32.mrb[0].mxu0
      %v477 = vadd.f32 %v326, %v476
      %v478 = vpop.f32.mrb[0].mxu0
      %v479 = vadd.f32 %v330, %v478
      %480 = vmatprep.mubr.bf16.mxu0 0
      %481 = vmatmul.mubr.bf16.gmra.mrb[0].mxu0 %v404
      %v482 = vpop.f32.mrb[0].mxu0
      %v483 = vadd.f32 %v326, %v482
      %v484 = vpop.f32.mrb[0].mxu0
      %v485 = vadd.f32 %v330, %v484
      %v486 = vpop.f32.mrb[0].mxu0
      %v487 = vadd.f32 %v326, %v486
      %v488 = vpop.f32.mrb[0].mxu0
      %v489 = vadd.f32 %v330, %v488
      %490 = vmatprep.mubr.bf16.mxu0 0
      %491 = vmatmul.mubr.bf16.gmra.mrb[0].mxu0 %v407
      %v492 = vpop.f32.mrb[0].mxu0
      %v493 = vadd.f32 %v326, %v492
      %v494 = vpop.f32.mrb[0].mxu0
      %v495 = vadd.f32 %v330, %v494
      %v496 = vpop.f32.mrb[0].mxu0
      %v497 = vadd.f32 %v326, %v496
      %v498 = vpop.f32.mrb[0].mxu0
      %v499 = vadd.f32 %v330, %v498
      %500 = vmatprep.mubr.bf16.mxu0 0
      %501 = vmatmul.mubr.bf16.gmra.mrb[0].mxu0 %v410
      %v502 = vpop.f32.mrb[0].mxu0
      %v503 = vadd.f32 %v326, %v502
      %v504 = vpop.f32.mrb[0].mxu0
      %v505 = vadd.f32 %v330, %v504
      %v506 = vpop.f32.mrb[0].mxu0
      %v507 = vadd.f32 %v326, %v506
      %v508 = vpop.f32.mrb[0].mxu0
      %v509 = vadd.f32 %v330, %v508
      %510 = vmatprep.mubr.bf16.mxu0 0
      %511 = vmatmul.mubr.bf16.gmra.mrb[0].mxu0 %v413
      %v512 = vpop.f32.mrb[0].mxu0
      %v513 = vadd.f32 %v326, %v512
      %v514 = vpop.f32.mrb[0].mxu0
      %v515 = vadd.f32 %v330, %v514
      %v516 = vpop.f32.mrb[0].mxu0
      %v517 = vadd.f32 %v326, %v516
      %v518 = vpop.f32.mrb[0].mxu0
      %v519 = vadd.f32 %v330, %v518
      %520 = vmatprep.mubr.bf16.mxu0 0
      %521 = vmatmul.mubr.bf16.gmra.mrb[0].mxu0 %v416
      %v522 = vpop.f32.mrb[0].mxu0
      %v523 = vadd.f32 %v326, %v522
      %v524 = vpop.f32.mrb[0].mxu0
      %v525 = vadd.f32 %v330, %v524
      %v526 = vpop.f32.mrb[0].mxu0
      %v527 = vadd.f32 %v326, %v526
      %v528 = vpop.f32.mrb[0].mxu0
      %v529 = vadd.f32 %v330, %v528
      %530 = vdwg.mxu0
      %v531 = vmax.f32 %v453, 0.0
      %v532 = vmax.f32 %v455, 0.0
      %v533 = vmax.f32 %v457, 0.0
      %v534 = vmax.f32 %v459, 0.0
      %v535 = vmax.f32 %v463, 0.0
      %v536 = vmax.f32 %v465, 0.0
      %v537 = vmax.f32 %v467, 0.0
      %v538 = vmax.f32 %v469, 0.0
      %v539 = vmax.f32 %v473, 0.0
      %v540 = vmax.f32 %v475, 0.0
      %v541 = vmax.f32 %v477, 0.0
      %v542 = vmax.f32 %v479, 0.0
      %v543 = vmax.f32 %v483, 0.0
      %v544 = vmax.f32 %v485, 0.0
      %v545 = vmax.f32 %v487, 0.0
      %v546 = vmax.f32 %v489, 0.0
      %v547 = vmax.f32 %v493, 0.0
      %v548 = vmax.f32 %v495, 0.0
      %v549 = vmax.f32 %v497, 0.0
      %v550 = vmax.f32 %v499, 0.0
      %v551 = vmax.f32 %v503, 0.0
      %v552 = vmax.f32 %v505, 0.0
      %v553 = vmax.f32 %v507, 0.0
      %v554 = vmax.f32 %v509, 0.0
      %v555 = vmax.f32 %v513, 0.0
      %v556 = vmax.f32 %v515, 0.0
      %v557 = vmax.f32 %v517, 0.0
      %v558 = vmax.f32 %v519, 0.0
      %v559 = vmax.f32 %v523, 0.0
      %v560 = vmax.f32 %v525, 0.0
      %v561 = vmax.f32 %v527, 0.0
      %v562 = vmax.f32 %v529, 0.0
      %v563 = vpack.c.bf16 %v533, %v531
      %v564 = vpack.c.bf16 %v534, %v532
      %v565 = vpack.c.bf16 %v537, %v535
      %v566 = vpack.c.bf16 %v538, %v536
      %v567 = vpack.c.bf16 %v541, %v539
      %v568 = vpack.c.bf16 %v542, %v540
      %v569 = vpack.c.bf16 %v545, %v543
      %v570 = vpack.c.bf16 %v546, %v544
      %v571 = vpack.c.bf16 %v549, %v547
      %v572 = vpack.c.bf16 %v550, %v548
      %v573 = vpack.c.bf16 %v553, %v551
      %v574 = vpack.c.bf16 %v554, %v552
      %v575 = vpack.c.bf16 %v557, %v555
      %v576 = vpack.c.bf16 %v558, %v556
      %v577 = vpack.c.bf16 %v561, %v559
      %v578 = vpack.c.bf16 %v562, %v560
      %v579 = vld [vmem:[%s3] sm:$0xf]
      %v580 = vld [vmem:[%s3 + $0x4] sm:$0xf]
      %v581 = vld [vmem:[%s3 + $0x8] sm:$0xf]
      %v582 = vld [vmem:[%s3 + $0xc] sm:$0xf]
      %v583 = vld [vmem:[%s3 + $0x10] sm:$0xf]
      %v584 = vld [vmem:[%s3 + $0x14] sm:$0xf]
      %v585 = vld [vmem:[%s3 + $0x18] sm:$0xf]
      %v586 = vld [vmem:[%s3 + $0x1c] sm:$0xf]
      %v587 = vld [vmem:[%s3 + $0x20] sm:$0xf]
      %v588 = vld [vmem:[%s3 + $0x24] sm:$0xf]
      %v589 = vld [vmem:[%s3 + $0x28] sm:$0xf]
      %v590 = vld [vmem:[%s3 + $0x2c] sm:$0xf]
      %v591 = vld [vmem:[%s3 + $0x30] sm:$0xf]
      %v592 = vld [vmem:[%s3 + $0x34] sm:$0xf]
      %v593 = vld [vmem:[%s3 + $0x38] sm:$0xf]
      %v594 = vld [vmem:[%s3 + $0x3c] sm:$0xf]
      %v595 = vld [vmem:[%s3 + $0x40] sm:$0xf]
      %v596 = vld [vmem:[%s3 + $0x44] sm:$0xf]
      %v597 = vld [vmem:[%s3 + $0x48] sm:$0xf]
      %v598 = vld [vmem:[%s3 + $0x4c] sm:$0xf]
      %v599 = vld [vmem:[%s3 + $0x50] sm:$0xf]
      %v600 = vld [vmem:[%s3 + $0x54] sm:$0xf]
      %v601 = vld [vmem:[%s3 + $0x58] sm:$0xf]
      %v602 = vld [vmem:[%s3 + $0x5c] sm:$0xf]
      %v603 = vld [vmem:[%s3 + $0x60] sm:$0xf]
      %v604 = vld [vmem:[%s3 + $0x64] sm:$0xf]
      %v605 = vld [vmem:[%s3 + $0x68] sm:$0xf]
      %v606 = vld [vmem:[%s3 + $0x6c] sm:$0xf]
      %v607 = vld [vmem:[%s3 + $0x70] sm:$0xf]
      %v608 = vld [vmem:[%s3 + $0x74] sm:$0xf]
      %v609 = vld [vmem:[%s3 + $0x78] sm:$0xf]
      %v610 = vld [vmem:[%s3 + $0x7c] sm:$0xf]
      %v611 = vld [vmem:[%s4] sm:$0x1]
      %v613 = vlaneseq
      %v614 = vshrl.u32 %v613, 7
      %v615 = vsub.s32 0, %v614
      %v616 = vrot.slane %v611, %v615
      %v650 = vunpack.c.l.b16 %v579
      %v651 = vunpack.c.l.b16 %v580
      %v652 = vunpack.c.l.b16 %v581
      %v653 = vunpack.c.l.b16 %v582
      %v654 = vunpack.c.l.b16 %v583
      %v655 = vunpack.c.l.b16 %v584
      %v656 = vunpack.c.l.b16 %v585
      %v657 = vunpack.c.l.b16 %v586
      %v658 = vunpack.c.l.b16 %v587
      %v659 = vunpack.c.l.b16 %v588
      %v660 = vunpack.c.l.b16 %v589
      %v661 = vunpack.c.l.b16 %v590
      %v662 = vunpack.c.l.b16 %v591
      %v663 = vunpack.c.l.b16 %v592
      %v664 = vunpack.c.l.b16 %v593
      %v665 = vunpack.c.l.b16 %v594
      %v666 = vunpack.c.l.b16 %v595
      %v667 = vunpack.c.l.b16 %v596
      %v668 = vunpack.c.l.b16 %v597
      %v669 = vunpack.c.l.b16 %v598
      %v670 = vunpack.c.l.b16 %v599
      %v671 = vunpack.c.l.b16 %v600
      %v672 = vunpack.c.l.b16 %v601
      %v673 = vunpack.c.l.b16 %v602
      %v674 = vunpack.c.l.b16 %v603
      %v675 = vunpack.c.l.b16 %v604
      %v676 = vunpack.c.l.b16 %v605
      %v677 = vunpack.c.l.b16 %v606
      %v678 = vunpack.c.l.b16 %v607
      %v679 = vunpack.c.l.b16 %v608
      %v680 = vunpack.c.l.b16 %v609
      %v681 = vunpack.c.l.b16 %v610
      %v682 = vpack.c.b16 %v651, %v650
      %v683 = vpack.c.b16 %v653, %v652
      %v684 = vpack.c.b16 %v655, %v654
      %v685 = vpack.c.b16 %v657, %v656
      %v686 = vpack.c.b16 %v659, %v658
      %v687 = vpack.c.b16 %v661, %v660
      %v688 = vpack.c.b16 %v663, %v662
      %v689 = vpack.c.b16 %v665, %v664
      %v690 = vpack.c.b16 %v667, %v666
      %v691 = vpack.c.b16 %v669, %v668
      %v692 = vpack.c.b16 %v671, %v670
      %v693 = vpack.c.b16 %v673, %v672
      %v694 = vpack.c.b16 %v675, %v674
      %v695 = vpack.c.b16 %v677, %v676
      %v696 = vpack.c.b16 %v679, %v678
      %v697 = vpack.c.b16 %v681, %v680
      %714 = vmatprep.subr.bf16.mxu0 0
      %715 = vmatpush1.bf16.msra.mxu0 %v682
      %716 = vmatprep.subr.bf16.mxu0 0
      %717 = vmatpush1.bf16.msra.mxu0 %v683
      %718 = vmatprep.subr.bf16.mxu0 0
      %719 = vmatpush1.bf16.msra.mxu0 %v684
      %720 = vmatprep.subr.bf16.mxu0 0
      %721 = vmatpush1.bf16.msra.mxu0 %v685
      %722 = vmatprep.subr.bf16.mxu0 0
      %723 = vmatpush1.bf16.msra.mxu0 %v686
      %724 = vmatprep.subr.bf16.mxu0 0
      %725 = vmatpush1.bf16.msra.mxu0 %v687
      %726 = vmatprep.subr.bf16.mxu0 0
      %727 = vmatpush1.bf16.msra.mxu0 %v688
      %728 = vmatprep.subr.bf16.mxu0 0
      %729 = vmatpush1.bf16.msra.mxu0 %v689
      %730 = vmatprep.subr.bf16.mxu0 0
      %731 = vmatpush1.bf16.msra.mxu0 %v690
      %732 = vmatprep.subr.bf16.mxu0 0
      %733 = vmatpush1.bf16.msra.mxu0 %v691
      %734 = vmatprep.subr.bf16.mxu0 0
      %735 = vmatpush1.bf16.msra.mxu0 %v692
      %736 = vmatprep.subr.bf16.mxu0 0
      %737 = vmatpush1.bf16.msra.mxu0 %v693
      %738 = vmatprep.subr.bf16.mxu0 0
      %739 = vmatpush1.bf16.msra.mxu0 %v694
      %740 = vmatprep.subr.bf16.mxu0 0
      %741 = vmatpush1.bf16.msra.mxu0 %v695
      %742 = vmatprep.subr.bf16.mxu0 0
      %743 = vmatpush1.bf16.msra.mxu0 %v696
      %744 = vmatprep.subr.bf16.mxu0 0
      %745 = vmatpush1.bf16.msra.mxu0 %v697
      %746 = vmatprep.mubr.bf16.mxu0 %v564
      %747 = vmatmul.mubr.bf16.gmra.mrb[0].mxu0 %v563
      %v748 = vpop.f32.mrb[0].mxu0
      %v749 = vadd.f32 %v616, %v748
      %v750 = vpop.f32.mrb[0].mxu0
      %v751 = vpop.f32.mrb[0].mxu0
      %v752 = vadd.f32 %v616, %v751
      %v753 = vpop.f32.mrb[0].mxu0
      %754 = vmatprep.mubr.bf16.mxu0 %v566
      %755 = vmatmul.mubr.bf16.gmra.mrb[0].mxu0 %v565
      %v756 = vpop.f32.mrb[0].mxu0
      %v757 = vadd.f32 %v616, %v756
      %v758 = vpop.f32.mrb[0].mxu0
      %v759 = vpop.f32.mrb[0].mxu0
      %v760 = vadd.f32 %v616, %v759
      %v761 = vpop.f32.mrb[0].mxu0
      %762 = vmatprep.mubr.bf16.mxu0 %v568
      %763 = vmatmul.mubr.bf16.gmra.mrb[0].mxu0 %v567
      %v764 = vpop.f32.mrb[0].mxu0
      %v765 = vadd.f32 %v616, %v764
      %v766 = vpop.f32.mrb[0].mxu0
      %v767 = vpop.f32.mrb[0].mxu0
      %v768 = vadd.f32 %v616, %v767
      %v769 = vpop.f32.mrb[0].mxu0
      %770 = vmatprep.mubr.bf16.mxu0 %v570
      %771 = vmatmul.mubr.bf16.gmra.mrb[0].mxu0 %v569
      %v772 = vpop.f32.mrb[0].mxu0
      %v773 = vadd.f32 %v616, %v772
      %v774 = vpop.f32.mrb[0].mxu0
      %v775 = vpop.f32.mrb[0].mxu0
      %v776 = vadd.f32 %v616, %v775
      %v777 = vpop.f32.mrb[0].mxu0
      %778 = vmatprep.mubr.bf16.mxu0 %v572
      %779 = vmatmul.mubr.bf16.gmra.mrb[0].mxu0 %v571
      %v780 = vpop.f32.mrb[0].mxu0
      %v781 = vadd.f32 %v616, %v780
      %v782 = vpop.f32.mrb[0].mxu0
      %v783 = vpop.f32.mrb[0].mxu0
      %v784 = vadd.f32 %v616, %v783
      %v785 = vpop.f32.mrb[0].mxu0
      %786 = vmatprep.mubr.bf16.mxu0 %v574
      %787 = vmatmul.mubr.bf16.gmra.mrb[0].mxu0 %v573
      %v788 = vpop.f32.mrb[0].mxu0
      %v789 = vadd.f32 %v616, %v788
      %v790 = vpop.f32.mrb[0].mxu0
      %v791 = vpop.f32.mrb[0].mxu0
      %v792 = vadd.f32 %v616, %v791
      %v793 = vpop.f32.mrb[0].mxu0
      %794 = vmatprep.mubr.bf16.mxu0 %v576
      %795 = vmatmul.mubr.bf16.gmra.mrb[0].mxu0 %v575
      %v796 = vpop.f32.mrb[0].mxu0
      %v797 = vadd.f32 %v616, %v796
      %v798 = vpop.f32.mrb[0].mxu0
      %v799 = vpop.f32.mrb[0].mxu0
      %v800 = vadd.f32 %v616, %v799
      %v801 = vpop.f32.mrb[0].mxu0
      %802 = vmatprep.mubr.bf16.mxu0 %v578
      %803 = vmatmul.mubr.bf16.gmra.mrb[0].mxu0 %v577
      %v804 = vpop.f32.mrb[0].mxu0
      %v805 = vadd.f32 %v616, %v804
      %v806 = vpop.f32.mrb[0].mxu0
      %v807 = vpop.f32.mrb[0].mxu0
      %v808 = vadd.f32 %v616, %v807
      %v809 = vpop.f32.mrb[0].mxu0
      %810 = vdwg.mxu0
      %v811 = vmax.f32 %v749, 0.0
      %v812 = vmax.f32 %v752, 0.0
      %v813 = vmax.f32 %v757, 0.0
      %v814 = vmax.f32 %v760, 0.0
      %v815 = vmax.f32 %v765, 0.0
      %v816 = vmax.f32 %v768, 0.0
      %v817 = vmax.f32 %v773, 0.0
      %v818 = vmax.f32 %v776, 0.0
      %v819 = vmax.f32 %v781, 0.0
      %v820 = vmax.f32 %v784, 0.0
      %v821 = vmax.f32 %v789, 0.0
      %v822 = vmax.f32 %v792, 0.0
      %v823 = vmax.f32 %v797, 0.0
      %v824 = vmax.f32 %v800, 0.0
      %v825 = vmax.f32 %v805, 0.0
      %v826 = vmax.f32 %v808, 0.0
      %v827 = vld [vmem:[%s5] sm:$0x1]
      %v829 = vlaneseq
      %v830 = vshrl.u32 %v829, 7
      %v831 = vsub.s32 0, %v830
      %v832 = vrot.slane %v827, %v831
      %v834 = vmul.f32 %v811, %v832
      %v835 = vmul.f32 %v812, %v832
      %v836 = vmul.f32 %v813, %v832
      %v837 = vmul.f32 %v814, %v832
      %v838 = vmul.f32 %v815, %v832
      %v839 = vmul.f32 %v816, %v832
      %v840 = vmul.f32 %v817, %v832
      %v841 = vmul.f32 %v818, %v832
      %v842 = vmul.f32 %v819, %v832
      %v843 = vmul.f32 %v820, %v832
      %v844 = vmul.f32 %v821, %v832
      %v845 = vmul.f32 %v822, %v832
      %v846 = vmul.f32 %v823, %v832
      %v847 = vmul.f32 %v824, %v832
      %v848 = vmul.f32 %v825, %v832
      %v849 = vmul.f32 %v826, %v832
      %850 = vadd.xlane.f32.xlu0 %v834
      %v851 = vpop.xlane.xlu0 %850
      %852 = vadd.xlane.f32.xlu0 %v835
      %v853 = vpop.xlane.xlu0 %852
      %854 = vadd.xlane.f32.xlu0 %v836
      %v855 = vpop.xlane.xlu0 %854
      %856 = vadd.xlane.f32.xlu0 %v837
      %v857 = vpop.xlane.xlu0 %856
      %858 = vadd.xlane.f32.xlu0 %v838
      %v859 = vpop.xlane.xlu0 %858
      %860 = vadd.xlane.f32.xlu0 %v839
      %v861 = vpop.xlane.xlu0 %860
      %862 = vadd.xlane.f32.xlu0 %v840
      %v863 = vpop.xlane.xlu0 %862
      %864 = vadd.xlane.f32.xlu0 %v841
      %v865 = vpop.xlane.xlu0 %864
      %866 = vadd.xlane.f32.xlu0 %v842
      %v867 = vpop.xlane.xlu0 %866
      %868 = vadd.xlane.f32.xlu0 %v843
      %v869 = vpop.xlane.xlu0 %868
      %870 = vadd.xlane.f32.xlu0 %v844
      %v871 = vpop.xlane.xlu0 %870
      %872 = vadd.xlane.f32.xlu0 %v845
      %v873 = vpop.xlane.xlu0 %872
      %874 = vadd.xlane.f32.xlu0 %v846
      %v875 = vpop.xlane.xlu0 %874
      %876 = vadd.xlane.f32.xlu0 %v847
      %v877 = vpop.xlane.xlu0 %876
      %878 = vadd.xlane.f32.xlu0 %v848
      %v879 = vpop.xlane.xlu0 %878
      %880 = vadd.xlane.f32.xlu0 %v849
      %v881 = vpop.xlane.xlu0 %880
      %v882 = vld [vmem:[#allocation2] sm:$0x1]
      %v884 = vlaneseq
      %v885 = vshrl.u32 %v884, 7
      %v886 = vsub.s32 0, %v885
      %v887 = vrot.slane %v882, %v886
      %v889 = vadd.f32 %v851, %v887
      %v890 = vadd.f32 %v853, %v887
      %v891 = vadd.f32 %v855, %v887
      %v892 = vadd.f32 %v857, %v887
      %v893 = vadd.f32 %v859, %v887
      %v894 = vadd.f32 %v861, %v887
      %v895 = vadd.f32 %v863, %v887
      %v896 = vadd.f32 %v865, %v887
      %v897 = vadd.f32 %v867, %v887
      %v898 = vadd.f32 %v869, %v887
      %v899 = vadd.f32 %v871, %v887
      %v900 = vadd.f32 %v873, %v887
      %v901 = vadd.f32 %v875, %v887
      %v902 = vadd.f32 %v877, %v887
      %v903 = vadd.f32 %v879, %v887
      %v904 = vadd.f32 %v881, %v887
      %vm905 = vcmask 7168
      %906 = vst.msk [vmem:[%s282] sm:$0xff] %vm905, %v889
      %907 = vst.msk [vmem:[%s282 + $0x8] sm:$0xff] %vm905, %v890
      %908 = vst.msk [vmem:[%s282 + $0x10] sm:$0xff] %vm905, %v891
      %909 = vst.msk [vmem:[%s282 + $0x18] sm:$0xff] %vm905, %v892
      %910 = vst.msk [vmem:[%s282 + $0x20] sm:$0xff] %vm905, %v893
      %911 = vst.msk [vmem:[%s282 + $0x28] sm:$0xff] %vm905, %v894
      %912 = vst.msk [vmem:[%s282 + $0x30] sm:$0xff] %vm905, %v895
      %913 = vst.msk [vmem:[%s282 + $0x38] sm:$0xff] %vm905, %v896
      %914 = vst.msk [vmem:[%s282 + $0x40] sm:$0xff] %vm905, %v897
      %915 = vst.msk [vmem:[%s282 + $0x48] sm:$0xff] %vm905, %v898
      %916 = vst.msk [vmem:[%s282 + $0x50] sm:$0xff] %vm905, %v899
      %917 = vst.msk [vmem:[%s282 + $0x58] sm:$0xff] %vm905, %v900
      %918 = vst.msk [vmem:[%s282 + $0x60] sm:$0xff] %vm905, %v901
      %919 = vst.msk [vmem:[%s282 + $0x68] sm:$0xff] %vm905, %v902
      %920 = vst.msk [vmem:[%s282 + $0x70] sm:$0xff] %vm905, %v903
      %921 = vst.msk [vmem:[%s282 + $0x78] sm:$0xff] %vm905, %v904
      %s922 = smul.u32 16, %s20
      %p923 = scmp.lt.s32.totalorder %s922, 31
      %s924 = scalar_select %p923, %s922, 31
      %s925 = smul.addr %s924, 8
      %s926 = scalar_lea.vmem %s7, %s925
      // Predicated region
      $region49: #{mlp_forward.1} parent=47 // pred_check
        %p927 = pneg %p190
      $region50: #{mlp_forward.1} parent=47 // pred_check_branch
        %929 = sbr.rel (%p927) target = $region52
      $region51: #{mlp_forward.1} parent=47 // pred_region
        %s930 = smul.u32 16, %s20
      $region52: #{mlp_forward.1} parent=47 // pred_fallthru
        _
    $region48: #{mlp_forward.1} parent=5 // pred_fallthru
      _
    %p931 = scmp.le.s32.totalorder 2, %s15
    // Predicated region
    $region53: #{mlp_forward.1} parent=5 // pred_check
      %p932 = pneg %p931
    $region54: #{mlp_forward.1} parent=5 // pred_check_branch
      %934 = sbr.rel (%p932) target = $region56
    $region55: #{mlp_forward.1} parent=5 // pred_region
      %s935 = ssub.s32 %s15, 2
      // Predicated region
      $region57: #{mlp_forward.1} parent=55 // pred_check
        %p936 = pneg %p196
      $region58: #{mlp_forward.1} parent=55 // pred_check_branch
        %938 = sbr.rel (%p936) target = $region60
      $region59: #{mlp_forward.1} parent=55 // pred_region
        %s939 = smul.u32 16, %s21
        %p940 = scmp.lt.s32.totalorder %s939, 31
        %s941 = scalar_select %p940, %s939, 31
        %s942 = smul.addr %s941, 8
        %s943 = scalar_lea.vmem %s7, %s942
      $region60: #{mlp_forward.1} parent=55 // pred_fallthru
        _
    $region56: #{mlp_forward.1} parent=5 // pred_fallthru
      _
  $region6: #{mlp_forward.1} parent=0 // loop_footer
    %s19 = sadd.s32 1, %s15
  $region7: #{mlp_forward.1} parent=0 // loop_footer_branch
    %14 = sbr.rel target = $region3
  $region8: #{mlp_forward.1} parent=0 // loop_exit
    _

</llo_original>
